<compile_context>
chip_gen: v6e
topology: v6e:2x2x1
jax: 0.10.0
libtpu: 0.0.40
codegen_flags: <defaults>
</compile_context>

<pallas_src>
import jax
import jax.numpy as jnp
from jax.experimental import pallas as pl
from jax.experimental.pallas import tpu as pltpu


def _cdiv(a, b):
    return -(-a // b)


def _sublane_multiple(dtype):
    # Packed sub-32-bit dtypes need taller sublane tiles (bf16 -> 16, int8 -> 32).
    itemsize = jnp.dtype(dtype).itemsize
    return {4: 8, 2: 16, 1: 32}.get(itemsize, 8)


def _choose_row_tile(rows, C, sub, row_budget):
    """Row-tile height: multiple of `sub` (or the full extent), preferring a
    divisor of C so each tile is a contiguous channel range of one image and
    the per-tile "all channels pruned" flag can actually fire."""
    row_budget = max(row_budget, sub)
    if rows <= row_budget:
        return rows                              # single full-extent row tile
    if C % sub == 0:
        best = 0
        d = sub
        top = min(C, row_budget)
        while d <= top:                          # largest divisor of C, multiple of sub
            if C % d == 0:
                best = d
            d += sub
        if best:
            return best
    # Not channel-alignable for this (C, dtype): plain sublane-aligned tile
    # (the pruned fast path will then rarely fire, which is harmless).
    return (row_budget // sub) * sub


def _choose_tiles(rows, cols, C, sub, itemsize, target_block_bytes):
    if cols * sub * itemsize <= target_block_bytes:
        # Full-width column blocks: lane-dense, single column tile, no column
        # padding ever (full-dim blocks are legal regardless of 128-alignment).
        tile_c = cols
        row_budget = max(sub, target_block_bytes // (cols * itemsize))
        tile_r = _choose_row_tile(rows, C, sub, row_budget)
    else:
        # Very wide rows: minimal sublane-aligned row strip + 128-multiple
        # column tile sized to the byte budget.  The last column block may be
        # ragged; Pallas clips the edge DMA, so no padded bytes hit HBM and no
        # wrapper pad/slice pass is needed.
        tile_r = sub if rows > sub else rows
        tile_c = (target_block_bytes // (tile_r * itemsize)) // 128 * 128
        tile_c = max(128, tile_c)
        tile_c = min(tile_c, cols)               # == cols (full dim) if budget exceeds it
    return tile_r, tile_c


def _mask_mul_kernel(flags_ref, x_ref, m_ref, o_ref):
    i = pl.program_id(0)

    @pl.when(flags_ref[i] != 0)
    def _():
        # (tile_r, 1) mask column broadcasts over the lane (spatial) axis.
        # Multiply stays in the input dtype: exact for 0/1 masks; PyTorch's
        # bf16*f32 -> f32 promotion is intentionally not replicated.
        o_ref[...] = x_ref[...] * m_ref[...]

    @pl.when(flags_ref[i] == 0)
    def _():
        # Every channel in this row tile is pruned: pure zero store, and the
        # flag-pinned x index_map elides this tile's input DMA entirely.
        # Note: writes +0.0, whereas a true x*0 gives -0.0 / NaN for negative
        # / non-finite x (acceptable for pruning; documented divergence).
        o_ref[...] = jnp.zeros_like(o_ref)


def structured_pruning_mask(x, mask, *, target_block_bytes=6 * 1024 * 1024):
    """out = x * mask[None, :, None, None] for x:(N,C,H,W), mask:(C,)."""
    N, C, H, W = x.shape
    dtype = x.dtype
    itemsize = jnp.dtype(dtype).itemsize
    sub = _sublane_multiple(dtype)

    rows, cols = N * C, H * W

    # Lane-dense 2D views; contiguous reshapes -> no extra HBM passes.
    x2d = x.reshape(rows, cols)
    m_col = jnp.tile(mask.astype(dtype), (N,)).reshape(rows, 1)

    tile_r, tile_c = _choose_tiles(rows, cols, C, sub, itemsize, target_block_bytes)
    n_row_tiles = _cdiv(rows, tile_r)
    n_col_tiles = _cdiv(cols, tile_c)

    # Per-row-tile "any channel alive" flags (tiny; scalar-prefetched to SMEM).
    row_alive = jnp.tile(mask != 0, (N,))
    pad_rows = n_row_tiles * tile_r - rows
    if pad_rows:
        row_alive = jnp.pad(row_alive, (0, pad_rows))        # pads with False
    flags = row_alive.reshape(n_row_tiles, tile_r).any(axis=1).astype(jnp.int32)

    def x_index_map(i, j, flags_ref):
        # Fully-pruned row tile: pin x's column block to 0 so consecutive grid
        # steps see an unchanged block index and the x input DMA is elided.
        # Safe because the pruned branch never reads x_ref.
        return (i, j * flags_ref[i])

    grid_spec = pltpu.PrefetchScalarGridSpec(
        num_scalar_prefetch=1,
        grid=(n_row_tiles, n_col_tiles),
        in_specs=[
            pl.BlockSpec((tile_r, tile_c), x_index_map),
            pl.BlockSpec((tile_r, 1), lambda i, j, flags_ref: (i, 0)),
        ],
        out_specs=pl.BlockSpec((tile_r, tile_c), lambda i, j, flags_ref: (i, j)),
    )

    out2d = pl.pallas_call(
        _mask_mul_kernel,
        out_shape=jax.ShapeDtypeStruct((rows, cols), dtype),
        grid_spec=grid_spec,
        compiler_params=pltpu.CompilerParams(
            # Tiles are fully independent: both axes parallel (v7x megacore
            # shards them across its 2 TensorCores; harmless on v5e/v6e).
            dimension_semantics=("parallel", "parallel"),
            # ~6 MiB blocks, double-buffered (x + out) ~= 24 MiB: above the
            # 16/32 MiB scoped-VMEM defaults but well under every generation's
            # physical VMEM (64 MiB on v7x, 128 MiB on v5e/v6e).
            vmem_limit_bytes=48 * 1024 * 1024,
        ),
    )(flags, x2d, m_col)

    # TODO(synk): for donated inputs with 0/1 masks, a manual-DMA in-place
    # variant (zero-fill only pruned channel rows, leave kept rows untouched)
    # would cut traffic from 2*|x| to ~pruned_fraction*|x| writes.
    return out2d.reshape(N, C, H, W)


if __name__ == "__main__":
    key = jax.random.PRNGKey(0)

    def check(shape, mask):
        x = jax.random.normal(key, shape, dtype=jnp.float32)
        out = jax.block_until_ready(structured_pruning_mask(x, mask))
        ref = x * mask.reshape(1, shape[1], 1, 1)
        assert out.shape == x.shape and out.dtype == x.dtype
        assert jnp.allclose(out, ref), f"mismatch vs reference for shape {shape}"

    # Deterministic structured (per-channel) mask: keep even channels, prune odd.
    mask4 = (jnp.arange(4) % 2 == 0).astype(jnp.float32)      # [1, 0, 1, 0]

    check((2, 4, 16, 16), mask4)   # 128-aligned spatial extent (H*W = 256)
    check((2, 4, 7, 7), mask4)     # ragged spatial extent: no wrapper pad/slice

    print("KERNEL_OK")
</pallas_src>

<mosaic_0001>
module attributes {stable_mosaic.version = 11 : i64} {
  func.func @_mask_mul_kernel(%arg0: i32, %arg1: i32, %arg2: memref<1xi32, #tpu.memory_space<smem>>, %arg3: memref<8x256xf32, #tpu.memory_space<vmem>>, %arg4: memref<8x1xf32, #tpu.memory_space<vmem>>, %arg5: memref<8x256xf32, #tpu.memory_space<vmem>>) attributes {dimension_semantics = [#tpu.dimension_semantics<parallel>, #tpu.dimension_semantics<parallel>], iteration_bounds = array<i64: 1, 1>, scalar_prefetch = 1 : i64, scratch_operands = 0 : i64, tpu.core_type = #tpu.core_type<tc>, window_params = [{transform_indices = @transform_0, window_bounds = array<i64: 8, 256>}, {transform_indices = @transform_1, window_bounds = array<i64: 8, 1>}, {transform_indices = @transform_2, window_bounds = array<i64: 8, 256>}]} {
    %0 = arith.index_cast %arg0 : i32 to index
    %1 = memref.load %arg2[%0] : memref<1xi32, #tpu.memory_space<smem>>
    %c0_i32 = arith.constant 0 : i32
    %2 = arith.cmpi ne, %1, %c0_i32 : i32
    %3 = arith.extui %2 : i1 to i32
    %c0_i32_0 = arith.constant 0 : i32
    %4 = arith.cmpi ne, %3, %c0_i32_0 : i32
    scf.if %4 {
      %c0 = arith.constant 0 : index
      %c0_3 = arith.constant 0 : index
      %10 = vector.load %arg3[%c0, %c0_3] : memref<8x256xf32, #tpu.memory_space<vmem>>, vector<8x256xf32>
      %c0_4 = arith.constant 0 : index
      %c0_5 = arith.constant 0 : index
      %11 = vector.load %arg4[%c0_4, %c0_5] : memref<8x1xf32, #tpu.memory_space<vmem>>, vector<8x1xf32>
      %12 = vector.broadcast %11 : vector<8x1xf32> to vector<8x256xf32>
      %13 = arith.mulf %10, %12 : vector<8x256xf32>
      %c0_6 = arith.constant 0 : index
      %c0_7 = arith.constant 0 : index
      %14 = vector.load %arg5[%c0_6, %c0_7] : memref<8x256xf32, #tpu.memory_space<vmem>>, vector<8x256xf32>
      tpu.vector_store %arg5[%c0_6, %c0_7], %13 {strides = array<i32>} : memref<8x256xf32, #tpu.memory_space<vmem>>, vector<8x256xf32>,
    } else {
    }
    %5 = arith.index_cast %arg0 : i32 to index
    %6 = memref.load %arg2[%5] : memref<1xi32, #tpu.memory_space<smem>>
    %c0_i32_1 = arith.constant 0 : i32
    %7 = arith.cmpi eq, %6, %c0_i32_1 : i32
    %8 = arith.extui %7 : i1 to i32
    %c0_i32_2 = arith.constant 0 : i32
    %9 = arith.cmpi ne, %8, %c0_i32_2 : i32
    scf.if %9 {
      %cst = arith.constant 0.000000e+00 : f32
      %10 = vector.broadcast %cst : f32 to vector<8x256xf32>
      %c0 = arith.constant 0 : index
      %c0_3 = arith.constant 0 : index
      %11 = vector.load %arg5[%c0, %c0_3] : memref<8x256xf32, #tpu.memory_space<vmem>>, vector<8x256xf32>
      tpu.vector_store %arg5[%c0, %c0_3], %10 {strides = array<i32>} : memref<8x256xf32, #tpu.memory_space<vmem>>, vector<8x256xf32>,
    } else {
    }
    return
  }
  func.func @transform_0(%arg0: i32, %arg1: i32, %arg2: memref<1xi32, #tpu.memory_space<smem>>) -> (i32, i32) {
    %0 = arith.index_cast %arg0 : i32 to index
    %1 = memref.load %arg2[%0] : memref<1xi32, #tpu.memory_space<smem>>
    %2 = arith.muli %arg1, %1 : i32
    %c0_i32 = arith.constant 0 : i32
    return %arg0, %2 : i32, i32
  }
  func.func @transform_1(%arg0: i32, %arg1: i32, %arg2: memref<1xi32, #tpu.memory_space<smem>>) -> (i32, i32) {
    %c0_i32 = arith.constant 0 : i32
    %c0_i32_0 = arith.constant 0 : i32
    return %arg0, %c0_i32 : i32, i32
  }
  func.func @transform_2(%arg0: i32, %arg1: i32, %arg2: memref<1xi32, #tpu.memory_space<smem>>) -> (i32, i32) {
    %c0_i32 = arith.constant 0 : i32
    return %arg0, %arg1 : i32, i32
  }
}

</mosaic_0001>

<llo_original>
// kernel: tpu_custom_call.1
$region0: #{tpu_custom_call.1}
  #allocation0 [shape = 'u32[]', space=smem, size = 0x4, offset = 0x4, fixed_abs, tag = 'smem constant byte address 0x4 - core index']
  #allocation1 [shape = 'u32[144,128]{1,0:T(1,128)}', space=vmem, size = 0x12000, scoped, tag = 'internal scratch']
  #allocation2 [shape = 's32[1]{0}', space=sflag, size = 0x4, scoped, tag = 'scoped memory for tpu_custom_call.1']
  #allocation3 [shape = 's32[1]{0:T(128)S(6)}', space=smem, size = 0x200, scoped, tag = 'prefetched SMEM operand 0']
  %s0 = inlined_call_operand.<no memory space> [shape: s32[1], index: 0, kind: input, shape index: {}]
  %s1 = inlined_call_operand.hbm [shape: f32[8,256], index: 1, kind: input, shape index: {}]
  %s2 = inlined_call_operand.vmem [shape: f32[8,1], index: 2, kind: input, shape index: {}]
  %s3 = inlined_call_operand.hbm [shape: f32[8,256], index: 3, kind: output, shape index: {}]
  %s4 = sld [smem:[#allocation0]]
  $region30: #{tpu_custom_call.1} parent=0
    _
  %s6 = ssub.s32 1, %s4
  %s7 = scalar_select 0, %s6, %s4
  %8 = sst [smem:[#allocation3]] %s0
  $region1: #{tpu_custom_call.1} parent=0
    #allocation4 [shape = 'u8[8192]{0}', space=vmem, size = 0x2000, scoped, tag = 'input window, operand 1, single buffered']
    #allocation5 [shape = 's32[1]{0}', space=sflag, size = 0x4, scoped, tag = 'scoped memory for tpu_custom_call.1']
    #allocation6 [shape = 's32[1]{0}', space=sflag, size = 0x4, scoped, tag = 'scoped memory for tpu_custom_call.1']
    #allocation7 [shape = 'u8[8192]{0}', space=vmem, size = 0x2000, scoped, tag = 'output window, operand 0, single buffered']
    %9 = vsyncpa [#allocation5], 0
    %10 = vsyncpa [#allocation6], 0
    // Predicated region
    $region2: #{tpu_custom_call.1} parent=1 // pred_check
      _
    $region3: #{tpu_custom_call.1} parent=1 // pred_check_branch
      %12 = sbr.rel (0) target = $region5
    $region4: #{tpu_custom_call.1} parent=1 // pred_region
      %s13 = sld [smem:[#allocation3]]
      %s14 = smul.u32 0, %s13
      %s15 = smul.u32 2, %s14
      %s17 = ssub.s32 256, 256
      %18 = vsyncadd [#allocation5], %s17
      %s19 = smul.addr %s15, 128
      %s20 = scalar_lea.hbm %s1, %s19
      %s22 = sshll.u32 [#allocation4], 4
      %s23 = int_to_ptr.vmem [resolvable:$true] %s22
      %25 = dma.hbm_to_vmem [thread:$0]  %s20, 256, %s23, [#allocation5]
    $region5: #{tpu_custom_call.1} parent=1 // pred_fallthru
      _
    // Predicated region
    $region6: #{tpu_custom_call.1} parent=1 // pred_check
      _
    $region7: #{tpu_custom_call.1} parent=1 // pred_check_branch
      %27 = sbr.rel (0) target = $region9
    $region8: #{tpu_custom_call.1} parent=1 // pred_region
      _
    $region9: #{tpu_custom_call.1} parent=1 // pred_fallthru
      _
    // Predicated region
    $region10: #{tpu_custom_call.1} parent=1 // pred_check
      _
    $region11: #{tpu_custom_call.1} parent=1 // pred_check_branch
      %29 = sbr.rel (0) target = $region13
    $region12: #{tpu_custom_call.1} parent=1 // pred_region
      %30 = dma.done [#allocation5], 256
    $region13: #{tpu_custom_call.1} parent=1 // pred_fallthru
      _
    %s31 = sld [smem:[#allocation3]]
    %s32 = smul.u32 0, %s31
    %s33 = smul.u32 2, %s32
    %s34 = sld [smem:[#allocation3]]
    %p35 = scmp.ne.s32.totalorder %s34, 0
    // Predicated region
    $region14: #{tpu_custom_call.1} parent=1 // pred_check
      %p36 = pneg %p35
    $region15: #{tpu_custom_call.1} parent=1 // pred_check_branch
      %38 = sbr.rel (%p36) target = $region17
    $region16: #{tpu_custom_call.1} parent=1 // pred_region
      %v39 = vld [vmem:[#allocation4] sm:$0xff]
      %v40 = vld [vmem:[#allocation4 + $0x8] sm:$0xff]
      %v41 = vld [vmem:[%s2] sm:$0xff]
      %43 = vset.pattern.permute.xlu0 0
      %44 = vperm.xlu0 %43, %v41
      %v45 = vpop.permute.xlu0 %44
      %v47 = vmul.f32 %v39, %v45
      %v48 = vmul.f32 %v40, %v45
      %49 = vst [vmem:[#allocation7] sm:$0xff] %v47
      %50 = vst [vmem:[#allocation7 + $0x8] sm:$0xff] %v48
    $region17: #{tpu_custom_call.1} parent=1 // pred_fallthru
      _
    %s51 = sld [smem:[#allocation3]]
    %p52 = scmp.eq.s32.totalorder %s51, 0
    // Predicated region
    $region18: #{tpu_custom_call.1} parent=1 // pred_check
      %p53 = pneg %p52
    $region19: #{tpu_custom_call.1} parent=1 // pred_check_branch
      %55 = sbr.rel (%p53) target = $region21
    $region20: #{tpu_custom_call.1} parent=1 // pred_region
      %56 = vst [vmem:[#allocation7] sm:$0xff] 0.0
      %57 = vst [vmem:[#allocation7 + $0x8] sm:$0xff] 0.0
    $region21: #{tpu_custom_call.1} parent=1 // pred_fallthru
      _
    // Predicated region
    $region22: #{tpu_custom_call.1} parent=1 // pred_check
      _
    $region23: #{tpu_custom_call.1} parent=1 // pred_check_branch
      %59 = sbr.rel (0) target = $region25
    $region24: #{tpu_custom_call.1} parent=1 // pred_region
      %s61 = ssub.s32 256, 256
      %62 = vsyncadd [#allocation6], %s61
      %s64 = sshll.u32 [#allocation7], 4
      %s65 = int_to_ptr.vmem [resolvable:$true] %s64
      %67 = dma.vmem_to_hbm [thread:$0]  %s65, 256, %s3, [#allocation6]
    $region25: #{tpu_custom_call.1} parent=1 // pred_fallthru
      _
    // Predicated region
    $region26: #{tpu_custom_call.1} parent=1 // pred_check
      _
    $region27: #{tpu_custom_call.1} parent=1 // pred_check_branch
      %69 = sbr.rel (0) target = $region29
    $region28: #{tpu_custom_call.1} parent=1 // pred_region
      %70 = dma.done [#allocation6], 256
    $region29: #{tpu_custom_call.1} parent=1 // pred_fallthru
      _
    %71 = vsyncpa [#allocation5], 1
    %72 = vsyncpa [#allocation6], 1

</llo_original>
